<compile_context>
chip_gen: v7x
topology: tpu7x:2x2x1
jax: 0.10.0
libtpu: 0.0.40
codegen_flags: <defaults>
</compile_context>

<pallas_src>
import functools
import math

import jax
import jax.numpy as jnp
from jax import lax
from jax.experimental import pallas as pl
from jax.experimental.pallas import tpu as pltpu


def _contrastive_loss_kernel(o1_ref, o2_ref, label_ref, out_ref, *,
                             margin, eps, feat, pack, valid_rows, block_rows):
    i = pl.program_id(0)

    # Elementwise diff (+ eps, matching torch.pairwise_distance), f32 accumulation (VPU).
    diff = o1_ref[...].astype(jnp.float32) - o2_ref[...].astype(jnp.float32) + eps
    dsq = diff * diff                                                   # (tb, pack*feat)

    if pack == 1:
        # Row-wise squared L2: lane-axis reduction (XLU).
        dist_sq = jnp.sum(dsq, axis=-1, keepdims=True)                  # (tb, 1)
    else:
        # `pack` original rows live side by side along the lane axis; do the
        # segmented per-row reduction on the (idle) MXU via a 0/1 indicator.
        k_idx = lax.broadcasted_iota(jnp.int32, (pack * feat, pack), 0)
        j_idx = lax.broadcasted_iota(jnp.int32, (pack * feat, pack), 1)
        seg = ((k_idx >= j_idx * feat) & (k_idx < (j_idx + 1) * feat)).astype(jnp.float32)
        dist_sq = jnp.dot(dsq, seg, precision=lax.Precision.HIGHEST,
                          preferred_element_type=jnp.float32)           # (tb, pack)

    dist = jnp.sqrt(dist_sq)                                            # EUP
    label = label_ref[...]                                              # (tb, pack)
    hinge = jnp.maximum(margin - dist, 0.0)
    # Positive term uses dist_sq directly (== dist**2, fewer ops, better numerics).
    per_pair = label * dist_sq + (1.0 - label) * (hinge * hinge)

    # Mask (packed) rows past the real batch so edge tiles never pollute the sum.
    row = lax.broadcasted_iota(jnp.int32, per_pair.shape, 0) + i * block_rows
    per_pair = jnp.where(row < valid_rows, per_pair, 0.0)

    tile_sum = jnp.sum(per_pair, axis=1, keepdims=True)                 # (tb, 1)
    tile_sum = jnp.sum(tile_sum, axis=0, keepdims=True)                 # (1, 1)
    out_ref[...] = jnp.broadcast_to(tile_sum.reshape(1, 1, 1), out_ref.shape)


def _round_up(x, m):
    return ((x + m - 1) // m) * m


def contrastive_loss(output1, output2, label, margin=2.0, eps=1e-6, block_rows=None):
    """output1, output2: (B, D); label: (B, 1). Returns scalar float32 loss."""
    B, D = output1.shape
    assert output2.shape == (B, D)
    assert label.shape == (B, 1)

    in_itemsize = max(jnp.dtype(output1.dtype).itemsize,
                      jnp.dtype(output2.dtype).itemsize)
    sublane = {1: 32, 2: 16}.get(in_itemsize, 8)

    # Lane packing for small feature dims: view `pack` consecutive rows as one
    # lane-dense (pack*D)-wide row (free, contiguous reshape).
    pack = 1
    if 0 < D < 128:
        pack = math.gcd(B, max(1, 128 // D))
    Bp, Dp = B // pack, pack * D

    o1 = output1.reshape(Bp, Dp)
    o2 = output2.reshape(Bp, Dp)
    lbl = label.astype(jnp.float32).reshape(Bp, pack)

    # Lane-padded, double-buffered VMEM bytes per packed row (2 inputs + label block).
    dp_pad = _round_up(Dp, 128)
    per_row_vmem = 2 * (2 * dp_pad * in_itemsize) + 2 * (128 * 4)

    if Bp <= sublane:
        tb = Bp                                   # single exact block (== full row dim)
    elif block_rows is not None:
        tb = min(_round_up(max(1, int(block_rows)), sublane), _round_up(Bp, sublane))
    else:
        vmem_data_budget = 36 * 1024 * 1024       # fits v7x's 64 MiB physical VMEM w/ headroom
        tb = max(sublane, (vmem_data_budget // per_row_vmem) // sublane * sublane)
        if tb >= Bp:
            # Keep >= 2 roughly balanced tiles so both v7x TensorCores stream.
            tb = (_round_up(pl.cdiv(Bp, 2), sublane) if Bp >= 2 * sublane
                  else _round_up(Bp, sublane))
        tb = min(tb, _round_up(Bp, sublane))

    num_tiles = pl.cdiv(Bp, tb)

    kernel = functools.partial(_contrastive_loss_kernel,
                               margin=float(margin), eps=float(eps),
                               feat=D, pack=pack, valid_rows=Bp, block_rows=tb)

    in_block_bytes = tb * dp_pad * in_itemsize
    label_block_bytes = tb * 128 * 4              # (tb, pack) lane-pads to 128
    out_block_bytes = 8 * 128 * 4
    footprint = 2 * (2 * in_block_bytes + label_block_bytes + out_block_bytes)
    vmem_limit = max(32 * 1024 * 1024, footprint + 8 * 1024 * 1024)

    partials = pl.pallas_call(
        kernel,
        out_shape=jax.ShapeDtypeStruct((num_tiles, 8, 128), jnp.float32),
        grid=(num_tiles,),
        in_specs=[
            pl.BlockSpec((tb, Dp), lambda i: (i, 0)),
            pl.BlockSpec((tb, Dp), lambda i: (i, 0)),
            pl.BlockSpec((tb, pack), lambda i: (i, 0)),
        ],
        out_specs=pl.BlockSpec((1, 8, 128), lambda i: (i, 0, 0)),
        compiler_params=pltpu.CompilerParams(
            dimension_semantics=("parallel",),    # independent batch tiles (megacore-friendly)
            vmem_limit_bytes=int(vmem_limit),
        ),
        cost_estimate=pl.CostEstimate(
            flops=4 * B * D + 8 * B,
            transcendentals=B,
            bytes_accessed=2 * B * D * in_itemsize + B * 4 + num_tiles * 8 * 128 * 4,
        ),
    )(o1, o2, lbl)

    # torch.mean over the B per-pair losses == sum of per-tile partial sums / B.
    return jnp.sum(partials[:, 0, 0]) / B


def _reference_loss(output1, output2, label, margin=2.0, eps=1e-6):
    diff = output1.astype(jnp.float32) - output2.astype(jnp.float32) + eps
    dist = jnp.sqrt(jnp.sum(diff * diff, axis=-1, keepdims=True))
    hinge = jnp.maximum(margin - dist, 0.0)
    return jnp.mean(label * dist**2 + (1.0 - label) * hinge**2)


if __name__ == "__main__":
    # Case 1: small siamese-embedding inputs (D=32 -> pack=4 rows per lane row).
    k1, k2, k3 = jax.random.split(jax.random.PRNGKey(0), 3)
    B, D = 8, 32
    o1 = jax.random.normal(k1, (B, D), dtype=jnp.float32)
    o2 = jax.random.normal(k2, (B, D), dtype=jnp.float32)
    lbl = jax.random.bernoulli(k3, 0.5, (B, 1)).astype(jnp.float32)
    loss = jax.block_until_ready(contrastive_loss(o1, o2, lbl, margin=2.0))
    ref = jax.block_until_ready(_reference_loss(o1, o2, lbl, margin=2.0))
    assert jnp.allclose(loss, ref, rtol=1e-5, atol=1e-5), (loss, ref)

    # Case 2: packed (pack=2) multi-tile grid with a masked partial edge tile.
    k4, k5, k6 = jax.random.split(jax.random.PRNGKey(1), 3)
    B2, D2 = 200, 48
    o1b = jax.random.normal(k4, (B2, D2), dtype=jnp.float32)
    o2b = jax.random.normal(k5, (B2, D2), dtype=jnp.float32)
    lblb = jax.random.bernoulli(k6, 0.5, (B2, 1)).astype(jnp.float32)
    loss2 = jax.block_until_ready(
        contrastive_loss(o1b, o2b, lblb, margin=2.0, block_rows=64))
    ref2 = jax.block_until_ready(_reference_loss(o1b, o2b, lblb, margin=2.0))
    assert jnp.allclose(loss2, ref2, rtol=1e-5, atol=1e-5), (loss2, ref2)

    # Case 3: unpacked path (D >= 128), auto-split into two balanced tiles.
    k7, k8, k9 = jax.random.split(jax.random.PRNGKey(2), 3)
    B3, D3 = 64, 256
    o1c = jax.random.normal(k7, (B3, D3), dtype=jnp.float32)
    o2c = jax.random.normal(k8, (B3, D3), dtype=jnp.float32)
    lblc = jax.random.bernoulli(k9, 0.5, (B3, 1)).astype(jnp.float32)
    loss3 = jax.block_until_ready(contrastive_loss(o1c, o2c, lblc, margin=2.0))
    ref3 = jax.block_until_ready(_reference_loss(o1c, o2c, lblc, margin=2.0))
    assert jnp.allclose(loss3, ref3, rtol=1e-5, atol=1e-5), (loss3, ref3)

    print("KERNEL_OK")
</pallas_src>

<mosaic_0001>
module attributes {stable_mosaic.version = 11 : i64} {
  func.func @_contrastive_loss_kernel(%arg0: i32, %arg1: memref<2x128xf32, #tpu.memory_space<vmem>>, %arg2: memref<2x128xf32, #tpu.memory_space<vmem>>, %arg3: memref<2x4xf32, #tpu.memory_space<vmem>>, %arg4: memref<1x8x128xf32, #tpu.memory_space<vmem>>) attributes {dimension_semantics = [#tpu.dimension_semantics<parallel>], iteration_bounds = array<i64: 1>, scalar_prefetch = 0 : i64, scratch_operands = 0 : i64, tpu.core_type = #tpu.core_type<tc>, window_params = [{transform_indices = @transform_0, window_bounds = array<i64: 2, 128>}, {transform_indices = @transform_1, window_bounds = array<i64: 2, 128>}, {transform_indices = @transform_2, window_bounds = array<i64: 2, 4>}, {transform_indices = @transform_3, window_bounds = array<i64: 1, 8, 128>}]} {
    %c0 = arith.constant 0 : index
    %c0_0 = arith.constant 0 : index
    %0 = vector.load %arg1[%c0, %c0_0] : memref<2x128xf32, #tpu.memory_space<vmem>>, vector<2x128xf32>
    %c0_1 = arith.constant 0 : index
    %c0_2 = arith.constant 0 : index
    %1 = vector.load %arg2[%c0_1, %c0_2] : memref<2x128xf32, #tpu.memory_space<vmem>>, vector<2x128xf32>
    %2 = arith.subf %0, %1 : vector<2x128xf32>
    %cst = arith.constant 9.99999997E-7 : f32
    %3 = vector.broadcast %cst : f32 to vector<2x128xf32>
    %4 = arith.addf %2, %3 : vector<2x128xf32>
    %5 = arith.mulf %4, %4 : vector<2x128xf32>
    %6 = tpu.iota {dimensions = array<i32: 0>} : vector<128x4xi32>
    %7 = tpu.iota {dimensions = array<i32: 1>} : vector<128x4xi32>
    %c32_i32 = arith.constant 32 : i32
    %8 = vector.broadcast %c32_i32 : i32 to vector<128x4xi32>
    %9 = arith.muli %7, %8 : vector<128x4xi32>
    %10 = arith.cmpi sge, %6, %9 : vector<128x4xi32>
    %c1_i32 = arith.constant 1 : i32
    %11 = vector.broadcast %c1_i32 : i32 to vector<128x4xi32>
    %12 = arith.addi %7, %11 : vector<128x4xi32>
    %c32_i32_3 = arith.constant 32 : i32
    %13 = vector.broadcast %c32_i32_3 : i32 to vector<128x4xi32>
    %14 = arith.muli %12, %13 : vector<128x4xi32>
    %15 = arith.cmpi slt, %6, %14 : vector<128x4xi32>
    %16 = arith.andi %10, %15 : vector<128x4xi1>
    %17 = arith.extui %16 : vector<128x4xi1> to vector<128x4xi32>
    %18 = arith.sitofp %17 : vector<128x4xi32> to vector<128x4xf32>
    %cst_4 = arith.constant dense<0.000000e+00> : vector<2x4xf32>
    %19 = tpu.matmul %5, %18, %cst_4 {dimension_numbers = #tpu.dot_dimension_numbers<[1], [0], [0], [1], [0, 0, 1, 1], [], []>, precision = #tpu.contract_precision<fp32>} : vector<2x128xf32>, vector<128x4xf32>, vector<2x4xf32> -> vector<2x4xf32>
    %20 = math.sqrt %19 : vector<2x4xf32>
    %c0_5 = arith.constant 0 : index
    %c0_6 = arith.constant 0 : index
    %21 = vector.load %arg3[%c0_5, %c0_6] : memref<2x4xf32, #tpu.memory_space<vmem>>, vector<2x4xf32>
    %cst_7 = arith.constant 2.000000e+00 : f32
    %22 = vector.broadcast %cst_7 : f32 to vector<2x4xf32>
    %23 = arith.subf %22, %20 : vector<2x4xf32>
    %cst_8 = arith.constant 0.000000e+00 : f32
    %24 = vector.broadcast %cst_8 : f32 to vector<2x4xf32>
    %25 = arith.maximumf %23, %24 : vector<2x4xf32>
    %26 = arith.mulf %21, %19 : vector<2x4xf32>
    %cst_9 = arith.constant 1.000000e+00 : f32
    %27 = vector.broadcast %cst_9 : f32 to vector<2x4xf32>
    %28 = arith.subf %27, %21 : vector<2x4xf32>
    %29 = arith.mulf %25, %25 : vector<2x4xf32>
    %30 = arith.mulf %28, %29 : vector<2x4xf32>
    %31 = arith.addf %26, %30 : vector<2x4xf32>
    %32 = tpu.iota {dimensions = array<i32: 0>} : vector<2x4xi32>
    %c2_i32 = arith.constant 2 : i32
    %33 = arith.muli %arg0, %c2_i32 : i32
    %34 = vector.broadcast %33 : i32 to vector<2x4xi32>
    %35 = arith.addi %32, %34 : vector<2x4xi32>
    %c2_i32_10 = arith.constant 2 : i32
    %36 = vector.broadcast %c2_i32_10 : i32 to vector<2x4xi32>
    %37 = arith.cmpi slt, %35, %36 : vector<2x4xi32>
    %cst_11 = arith.constant 0.000000e+00 : f32
    %38 = vector.broadcast %cst_11 : f32 to vector<2x4xf32>
    %39 = arith.select %37, %31, %38 : vector<2x4xi1>, vector<2x4xf32>
    %cst_12 = arith.constant dense<0.000000e+00> : vector<2xf32>
    %40 = vector.multi_reduction <add>, %39, %cst_12 [1] : vector<2x4xf32> to vector<2xf32>
    %41 = vector.shape_cast %40 : vector<2xf32> to vector<2x1xf32>
    %cst_13 = arith.constant dense<0.000000e+00> : vector<1xf32>
    %42 = vector.multi_reduction <add>, %41, %cst_13 [0] : vector<2x1xf32> to vector<1xf32>
    %43 = vector.shape_cast %42 : vector<1xf32> to vector<1x1xf32>
    %44 = vector.shape_cast %43 : vector<1x1xf32> to vector<1x1x1xf32>
    %45 = vector.shape_cast %44 : vector<1x1x1xf32> to vector<1x1x1xf32>
    %46 = vector.broadcast %45 : vector<1x1x1xf32> to vector<1x8x128xf32>
    %c0_14 = arith.constant 0 : index
    %c0_15 = arith.constant 0 : index
    %c0_16 = arith.constant 0 : index
    %47 = vector.load %arg4[%c0_14, %c0_15, %c0_16] : memref<1x8x128xf32, #tpu.memory_space<vmem>>, vector<1x8x128xf32>
    tpu.vector_store %arg4[%c0_14, %c0_15, %c0_16], %46 {strides = array<i32>} : memref<1x8x128xf32, #tpu.memory_space<vmem>>, vector<1x8x128xf32>,
    return
  }
  func.func @transform_0(%arg0: i32) -> (i32, i32) {
    %c0_i32 = arith.constant 0 : i32
    %c0_i32_0 = arith.constant 0 : i32
    return %arg0, %c0_i32 : i32, i32
  }
  func.func @transform_1(%arg0: i32) -> (i32, i32) {
    %c0_i32 = arith.constant 0 : i32
    %c0_i32_0 = arith.constant 0 : i32
    return %arg0, %c0_i32 : i32, i32
  }
  func.func @transform_2(%arg0: i32) -> (i32, i32) {
    %c0_i32 = arith.constant 0 : i32
    %c0_i32_0 = arith.constant 0 : i32
    return %arg0, %c0_i32 : i32, i32
  }
  func.func @transform_3(%arg0: i32) -> (i32, i32, i32) {
    %c0_i32 = arith.constant 0 : i32
    %c0_i32_0 = arith.constant 0 : i32
    %c0_i32_1 = arith.constant 0 : i32
    return %arg0, %c0_i32, %c0_i32_0 : i32, i32, i32
  }
}

</mosaic_0001>

<llo_original>
// kernel: tpu_custom_call.1
$region0: #{tpu_custom_call.1}
  #allocation0 [shape = 'u32[]', space=smem, size = 0x4, offset = 0x4, fixed_abs, tag = 'smem constant byte address 0x4 - core index']
  #allocation1 [shape = 'u32[144,128]{1,0:T(1,128)}', space=vmem, size = 0x12000, scoped, tag = 'internal scratch']
  %s0 = inlined_call_operand.hbm [shape: f32[2,128], index: 0, kind: input, shape index: {}]
  %s1 = inlined_call_operand.vmem [shape: f32[2,128], index: 1, kind: input, shape index: {}]
  %s2 = inlined_call_operand.vmem [shape: f32[2,4], index: 2, kind: input, shape index: {}]
  %s3 = inlined_call_operand.hbm [shape: f32[1,8,128], index: 3, kind: output, shape index: {}]
  %s4 = sld [smem:[#allocation0]]
  $region26: #{tpu_custom_call.1} parent=0
    _
  %s6 = ssub.s32 1, %s4
  %s7 = scalar_select 0, %s6, %s4
  $region1: #{tpu_custom_call.1} parent=0
    #allocation2 [shape = 'u8[1024]{0}', space=vmem, size = 0x400, scoped, tag = 'input window, operand 0, single buffered']
    #allocation3 [shape = 's32[1]{0}', space=sflag, size = 0x4, scoped, tag = 'scoped memory for tpu_custom_call.1']
    #allocation4 [shape = 's32[1]{0}', space=sflag, size = 0x4, scoped, tag = 'scoped memory for tpu_custom_call.1']
    #allocation5 [shape = 'u8[4096]{0}', space=vmem, size = 0x1000, scoped, tag = 'output window, operand 0, single buffered']
    %8 = vsyncpa [#allocation3], 0
    %9 = vsyncpa [#allocation4], 0
    // Predicated region
    $region2: #{tpu_custom_call.1} parent=1 // pred_check
      _
    $region3: #{tpu_custom_call.1} parent=1 // pred_check_branch
      %11 = sbr.rel (0) target = $region5
    $region4: #{tpu_custom_call.1} parent=1 // pred_region
      %s13 = ssub.s32 32, 32
      %14 = vsyncadd [#allocation3], %s13
      %s16 = sshll.u32 [#allocation2], 4
      %s17 = int_to_ptr.vmem [resolvable:$true] %s16
      %19 = dma.hbm_to_vmem [thread:$0]  %s0, 32, %s17, [#allocation3]
    $region5: #{tpu_custom_call.1} parent=1 // pred_fallthru
      _
    // Predicated region
    $region6: #{tpu_custom_call.1} parent=1 // pred_check
      _
    $region7: #{tpu_custom_call.1} parent=1 // pred_check_branch
      %21 = sbr.rel (0) target = $region9
    $region8: #{tpu_custom_call.1} parent=1 // pred_region
      _
    $region9: #{tpu_custom_call.1} parent=1 // pred_fallthru
      _
    // Predicated region
    $region10: #{tpu_custom_call.1} parent=1 // pred_check
      _
    $region11: #{tpu_custom_call.1} parent=1 // pred_check_branch
      %23 = sbr.rel (0) target = $region13
    $region12: #{tpu_custom_call.1} parent=1 // pred_region
      _
    $region13: #{tpu_custom_call.1} parent=1 // pred_fallthru
      _
    // Predicated region
    $region14: #{tpu_custom_call.1} parent=1 // pred_check
      _
    $region15: #{tpu_custom_call.1} parent=1 // pred_check_branch
      %25 = sbr.rel (0) target = $region17
    $region16: #{tpu_custom_call.1} parent=1 // pred_region
      %26 = dma.done [#allocation3], 32
    $region17: #{tpu_custom_call.1} parent=1 // pred_fallthru
      _
    %v27 = vld [vmem:[#allocation2] sm:$0x3]
    %v28 = vld [vmem:[%s1] sm:$0x3]
    %v29 = vsub.f32 %v27, %v28
    %v30 = vadd.f32 %v29, 1e-06
    %v31 = vmul.f32 %v30, %v30
    %v32 = vlaneseq
    %v33 = vshrl.u32 %v32, 7
    %v34 = vadd.s32 %v33, 8
    %v35 = vadd.s32 %v33, 16
    %v36 = vadd.s32 %v33, 24
    %v37 = vadd.s32 %v33, 32
    %v38 = vadd.s32 %v33, 40
    %v39 = vadd.s32 %v33, 48
    %v40 = vadd.s32 %v33, 56
    %v41 = vadd.s32 %v33, 64
    %v42 = vadd.s32 %v33, 72
    %v43 = vadd.s32 %v33, 80
    %v44 = vadd.s32 %v33, 88
    %v45 = vadd.s32 %v33, 96
    %v46 = vadd.s32 %v33, 104
    %v47 = vadd.s32 %v33, 112
    %v48 = vadd.s32 %v33, 120
    %v49 = vlaneseq
    %v50 = vand.u32 %v49, 127
    %v51 = vmul.u32 %v50, 32
    %vm52 = vcmp.ge.s32.totalorder %v33, %v51
    %vm53 = vcmp.ge.s32.totalorder %v34, %v51
    %vm54 = vcmp.ge.s32.totalorder %v35, %v51
    %vm55 = vcmp.ge.s32.totalorder %v36, %v51
    %vm56 = vcmp.ge.s32.totalorder %v37, %v51
    %vm57 = vcmp.ge.s32.totalorder %v38, %v51
    %vm58 = vcmp.ge.s32.totalorder %v39, %v51
    %vm59 = vcmp.ge.s32.totalorder %v40, %v51
    %vm60 = vcmp.ge.s32.totalorder %v41, %v51
    %vm61 = vcmp.ge.s32.totalorder %v42, %v51
    %vm62 = vcmp.ge.s32.totalorder %v43, %v51
    %vm63 = vcmp.ge.s32.totalorder %v44, %v51
    %vm64 = vcmp.ge.s32.totalorder %v45, %v51
    %vm65 = vcmp.ge.s32.totalorder %v46, %v51
    %vm66 = vcmp.ge.s32.totalorder %v47, %v51
    %vm67 = vcmp.ge.s32.totalorder %v48, %v51
    %v68 = vadd.s32 %v50, 1
    %v69 = vmul.u32 %v68, 32
    %vm70 = vcmp.lt.s32.totalorder %v33, %v69
    %vm71 = vcmp.lt.s32.totalorder %v34, %v69
    %vm72 = vcmp.lt.s32.totalorder %v35, %v69
    %vm73 = vcmp.lt.s32.totalorder %v36, %v69
    %vm74 = vcmp.lt.s32.totalorder %v37, %v69
    %vm75 = vcmp.lt.s32.totalorder %v38, %v69
    %vm76 = vcmp.lt.s32.totalorder %v39, %v69
    %vm77 = vcmp.lt.s32.totalorder %v40, %v69
    %vm78 = vcmp.lt.s32.totalorder %v41, %v69
    %vm79 = vcmp.lt.s32.totalorder %v42, %v69
    %vm80 = vcmp.lt.s32.totalorder %v43, %v69
    %vm81 = vcmp.lt.s32.totalorder %v44, %v69
    %vm82 = vcmp.lt.s32.totalorder %v45, %v69
    %vm83 = vcmp.lt.s32.totalorder %v46, %v69
    %vm84 = vcmp.lt.s32.totalorder %v47, %v69
    %vm85 = vcmp.lt.s32.totalorder %v48, %v69
    %vm86 = vmand %vm52, %vm70
    %vm87 = vmand %vm53, %vm71
    %vm88 = vmand %vm54, %vm72
    %vm89 = vmand %vm55, %vm73
    %vm90 = vmand %vm56, %vm74
    %vm91 = vmand %vm57, %vm75
    %vm92 = vmand %vm58, %vm76
    %vm93 = vmand %vm59, %vm77
    %vm94 = vmand %vm60, %vm78
    %vm95 = vmand %vm61, %vm79
    %vm96 = vmand %vm62, %vm80
    %vm97 = vmand %vm63, %vm81
    %vm98 = vmand %vm64, %vm82
    %vm99 = vmand %vm65, %vm83
    %vm100 = vmand %vm66, %vm84
    %vm101 = vmand %vm67, %vm85
    %v102 = vsel %vm86, 1, 0
    %v103 = vsel %vm87, 1, 0
    %v104 = vsel %vm88, 1, 0
    %v105 = vsel %vm89, 1, 0
    %v106 = vsel %vm90, 1, 0
    %v107 = vsel %vm91, 1, 0
    %v108 = vsel %vm92, 1, 0
    %v109 = vsel %vm93, 1, 0
    %v110 = vsel %vm94, 1, 0
    %v111 = vsel %vm95, 1, 0
    %v112 = vsel %vm96, 1, 0
    %v113 = vsel %vm97, 1, 0
    %v114 = vsel %vm98, 1, 0
    %v115 = vsel %vm99, 1, 0
    %v116 = vsel %vm100, 1, 0
    %v117 = vsel %vm101, 1, 0
    %v118 = vcvt.s32.f32 %v102
    %v119 = vcvt.s32.f32 %v103
    %v120 = vcvt.s32.f32 %v104
    %v121 = vcvt.s32.f32 %v105
    %v122 = vcvt.s32.f32 %v106
    %v123 = vcvt.s32.f32 %v107
    %v124 = vcvt.s32.f32 %v108
    %v125 = vcvt.s32.f32 %v109
    %v126 = vcvt.s32.f32 %v110
    %v127 = vcvt.s32.f32 %v111
    %v128 = vcvt.s32.f32 %v112
    %v129 = vcvt.s32.f32 %v113
    %v130 = vcvt.s32.f32 %v114
    %v131 = vcvt.s32.f32 %v115
    %v132 = vcvt.s32.f32 %v116
    %v133 = vcvt.s32.f32 %v117
    %134 = vmatprep.subr.mxu0 0.0
    %v135 = vand.u32 %v118, 4294901760
    %136 = vmatpush1.msra.mxu0 %v135
    %137 = vmatprep.subr.mxu0 0.0
    %v138 = vand.u32 %v119, 4294901760
    %139 = vmatpush1.msra.mxu0 %v138
    %140 = vmatprep.subr.mxu0 0.0
    %v141 = vand.u32 %v120, 4294901760
    %142 = vmatpush1.msra.mxu0 %v141
    %143 = vmatprep.subr.mxu0 0.0
    %v144 = vand.u32 %v121, 4294901760
    %145 = vmatpush1.msra.mxu0 %v144
    %146 = vmatprep.subr.mxu0 0.0
    %v147 = vand.u32 %v122, 4294901760
    %148 = vmatpush1.msra.mxu0 %v147
    %149 = vmatprep.subr.mxu0 0.0
    %v150 = vand.u32 %v123, 4294901760
    %151 = vmatpush1.msra.mxu0 %v150
    %152 = vmatprep.subr.mxu0 0.0
    %v153 = vand.u32 %v124, 4294901760
    %154 = vmatpush1.msra.mxu0 %v153
    %155 = vmatprep.subr.mxu0 0.0
    %v156 = vand.u32 %v125, 4294901760
    %157 = vmatpush1.msra.mxu0 %v156
    %158 = vmatprep.subr.mxu0 0.0
    %v159 = vand.u32 %v126, 4294901760
    %160 = vmatpush1.msra.mxu0 %v159
    %161 = vmatprep.subr.mxu0 0.0
    %v162 = vand.u32 %v127, 4294901760
    %163 = vmatpush1.msra.mxu0 %v162
    %164 = vmatprep.subr.mxu0 0.0
    %v165 = vand.u32 %v128, 4294901760
    %166 = vmatpush1.msra.mxu0 %v165
    %167 = vmatprep.subr.mxu0 0.0
    %v168 = vand.u32 %v129, 4294901760
    %169 = vmatpush1.msra.mxu0 %v168
    %170 = vmatprep.subr.mxu0 0.0
    %v171 = vand.u32 %v130, 4294901760
    %172 = vmatpush1.msra.mxu0 %v171
    %173 = vmatprep.subr.mxu0 0.0
    %v174 = vand.u32 %v131, 4294901760
    %175 = vmatpush1.msra.mxu0 %v174
    %176 = vmatprep.subr.mxu0 0.0
    %v177 = vand.u32 %v132, 4294901760
    %178 = vmatpush1.msra.mxu0 %v177
    %179 = vmatprep.subr.mxu0 0.0
    %v180 = vand.u32 %v133, 4294901760
    %181 = vmatpush1.msra.mxu0 %v180
    %182 = vmatprep.subr.mxu0 0.0
    %183 = vmatpush1.msra.mxu0 0.0
    %184 = vmatprep.subr.mxu0 0.0
    %185 = vmatpush1.msra.mxu0 0.0
    %186 = vmatprep.subr.mxu0 0.0
    %187 = vmatpush1.msra.mxu0 0.0
    %188 = vmatprep.subr.mxu0 0.0
    %189 = vmatpush1.msra.mxu0 0.0
    %190 = vmatprep.subr.mxu0 0.0
    %191 = vmatpush1.msra.mxu0 0.0
    %192 = vmatprep.subr.mxu0 0.0
    %193 = vmatpush1.msra.mxu0 0.0
    %194 = vmatprep.subr.mxu0 0.0
    %195 = vmatpush1.msra.mxu0 0.0
    %196 = vmatprep.subr.mxu0 0.0
    %197 = vmatpush1.msra.mxu0 0.0
    %198 = vmatprep.subr.mxu0 0.0
    %199 = vmatpush1.msra.mxu0 0.0
    %200 = vmatprep.subr.mxu0 0.0
    %201 = vmatpush1.msra.mxu0 0.0
    %202 = vmatprep.subr.mxu0 0.0
    %203 = vmatpush1.msra.mxu0 0.0
    %204 = vmatprep.subr.mxu0 0.0
    %205 = vmatpush1.msra.mxu0 0.0
    %206 = vmatprep.subr.mxu0 0.0
    %207 = vmatpush1.msra.mxu0 0.0
    %208 = vmatprep.subr.mxu0 0.0
    %209 = vmatpush1.msra.mxu0 0.0
    %210 = vmatprep.subr.mxu0 0.0
    %211 = vmatpush1.msra.mxu0 0.0
    %212 = vmatprep.subr.mxu0 0.0
    %213 = vmatpush1.msra.mxu0 0.0
    %214 = vmatprep.mubr.f32.mxu0 0.0
    %v215 = vand.u32 %v31, 4294901760
    %v216 = vsub.f32 %v31, %v215
    %v217 = vand.u32 %v216, 4294901760
    %v218 = vsub.f32 %v216, %v217
    %v219 = vand.u32 %v218, 4294901760
    %220 = vmatmul.mubr.f32.gmra.mrb[0].mxu0 %v219
    %v221 = vpop.f32.mrb[0].mxu0
    %v222 = vadd.f32 0.0, %v221
    %v223 = vpop.f32.mrb[0].mxu0
    %224 = vdwg.mxu0
    %225 = vmatprep.subr.mxu0 0.0
    %v226 = vand.u32 %v118, 4294901760
    %v227 = vsub.f32 %v118, %v226
    %v228 = vand.u32 %v227, 4294901760
    %v229 = vsub.f32 %v227, %v228
    %v230 = vand.u32 %v229, 4294901760
    %231 = vmatpush1.msra.mxu0 %v230
    %232 = vmatprep.subr.mxu0 0.0
    %v233 = vand.u32 %v119, 4294901760
    %v234 = vsub.f32 %v119, %v233
    %v235 = vand.u32 %v234, 4294901760
    %v236 = vsub.f32 %v234, %v235
    %v237 = vand.u32 %v236, 4294901760
    %238 = vmatpush1.msra.mxu0 %v237
    %239 = vmatprep.subr.mxu0 0.0
    %v240 = vand.u32 %v120, 4294901760
    %v241 = vsub.f32 %v120, %v240
    %v242 = vand.u32 %v241, 4294901760
    %v243 = vsub.f32 %v241, %v242
    %v244 = vand.u32 %v243, 4294901760
    %245 = vmatpush1.msra.mxu0 %v244
    %246 = vmatprep.subr.mxu0 0.0
    %v247 = vand.u32 %v121, 4294901760
    %v248 = vsub.f32 %v121, %v247
    %v249 = vand.u32 %v248, 4294901760
    %v250 = vsub.f32 %v248, %v249
    %v251 = vand.u32 %v250, 4294901760
    %252 = vmatpush1.msra.mxu0 %v251
    %253 = vmatprep.subr.mxu0 0.0
    %v254 = vand.u32 %v122, 4294901760
    %v255 = vsub.f32 %v122, %v254
    %v256 = vand.u32 %v255, 4294901760
    %v257 = vsub.f32 %v255, %v256
    %v258 = vand.u32 %v257, 4294901760
    %259 = vmatpush1.msra.mxu0 %v258
    %260 = vmatprep.subr.mxu0 0.0
    %v261 = vand.u32 %v123, 4294901760
    %v262 = vsub.f32 %v123, %v261
    %v263 = vand.u32 %v262, 4294901760
    %v264 = vsub.f32 %v262, %v263
    %v265 = vand.u32 %v264, 4294901760
    %266 = vmatpush1.msra.mxu0 %v265
    %267 = vmatprep.subr.mxu0 0.0
    %v268 = vand.u32 %v124, 4294901760
    %v269 = vsub.f32 %v124, %v268
    %v270 = vand.u32 %v269, 4294901760
    %v271 = vsub.f32 %v269, %v270
    %v272 = vand.u32 %v271, 4294901760
    %273 = vmatpush1.msra.mxu0 %v272
    %274 = vmatprep.subr.mxu0 0.0
    %v275 = vand.u32 %v125, 4294901760
    %v276 = vsub.f32 %v125, %v275
    %v277 = vand.u32 %v276, 4294901760
    %v278 = vsub.f32 %v276, %v277
    %v279 = vand.u32 %v278, 4294901760
    %280 = vmatpush1.msra.mxu0 %v279
    %281 = vmatprep.subr.mxu0 0.0
    %v282 = vand.u32 %v126, 4294901760
    %v283 = vsub.f32 %v126, %v282
    %v284 = vand.u32 %v283, 4294901760
    %v285 = vsub.f32 %v283, %v284
    %v286 = vand.u32 %v285, 4294901760
    %287 = vmatpush1.msra.mxu0 %v286
    %288 = vmatprep.subr.mxu0 0.0
    %v289 = vand.u32 %v127, 4294901760
    %v290 = vsub.f32 %v127, %v289
    %v291 = vand.u32 %v290, 4294901760
    %v292 = vsub.f32 %v290, %v291
    %v293 = vand.u32 %v292, 4294901760
    %294 = vmatpush1.msra.mxu0 %v293
    %295 = vmatprep.subr.mxu0 0.0
    %v296 = vand.u32 %v128, 4294901760
    %v297 = vsub.f32 %v128, %v296
    %v298 = vand.u32 %v297, 4294901760
    %v299 = vsub.f32 %v297, %v298
    %v300 = vand.u32 %v299, 4294901760
    %301 = vmatpush1.msra.mxu0 %v300
    %302 = vmatprep.subr.mxu0 0.0
    %v303 = vand.u32 %v129, 4294901760
    %v304 = vsub.f32 %v129, %v303
    %v305 = vand.u32 %v304, 4294901760
    %v306 = vsub.f32 %v304, %v305
    %v307 = vand.u32 %v306, 4294901760
    %308 = vmatpush1.msra.mxu0 %v307
    %309 = vmatprep.subr.mxu0 0.0
    %v310 = vand.u32 %v130, 4294901760
    %v311 = vsub.f32 %v130, %v310
    %v312 = vand.u32 %v311, 4294901760
    %v313 = vsub.f32 %v311, %v312
    %v314 = vand.u32 %v313, 4294901760
    %315 = vmatpush1.msra.mxu0 %v314
    %316 = vmatprep.subr.mxu0 0.0
    %v317 = vand.u32 %v131, 4294901760
    %v318 = vsub.f32 %v131, %v317
    %v319 = vand.u32 %v318, 4294901760
    %v320 = vsub.f32 %v318, %v319
    %v321 = vand.u32 %v320, 4294901760
    %322 = vmatpush1.msra.mxu0 %v321
    %323 = vmatprep.subr.mxu0 0.0
    %v324 = vand.u32 %v132, 4294901760
    %v325 = vsub.f32 %v132, %v324
    %v326 = vand.u32 %v325, 4294901760
    %v327 = vsub.f32 %v325, %v326
    %v328 = vand.u32 %v327, 4294901760
    %329 = vmatpush1.msra.mxu0 %v328
    %330 = vmatprep.subr.mxu0 0.0
    %v331 = vand.u32 %v133, 4294901760
    %v332 = vsub.f32 %v133, %v331
    %v333 = vand.u32 %v332, 4294901760
    %v334 = vsub.f32 %v332, %v333
    %v335 = vand.u32 %v334, 4294901760
    %336 = vmatpush1.msra.mxu0 %v335
    %337 = vmatprep.subr.mxu0 0.0
    %338 = vmatpush1.msra.mxu0 0.0
    %339 = vmatprep.subr.mxu0 0.0
    %340 = vmatpush1.msra.mxu0 0.0
    %341 = vmatprep.subr.mxu0 0.0
    %342 = vmatpush1.msra.mxu0 0.0
    %343 = vmatprep.subr.mxu0 0.0
    %344 = vmatpush1.msra.mxu0 0.0
    %345 = vmatprep.subr.mxu0 0.0
    %346 = vmatpush1.msra.mxu0 0.0
    %347 = vmatprep.subr.mxu0 0.0
    %348 = vmatpush1.msra.mxu0 0.0
    %349 = vmatprep.subr.mxu0 0.0
    %350 = vmatpush1.msra.mxu0 0.0
    %351 = vmatprep.subr.mxu0 0.0
    %352 = vmatpush1.msra.mxu0 0.0
    %353 = vmatprep.subr.mxu0 0.0
    %354 = vmatpush1.msra.mxu0 0.0
    %355 = vmatprep.subr.mxu0 0.0
    %356 = vmatpush1.msra.mxu0 0.0
    %357 = vmatprep.subr.mxu0 0.0
    %358 = vmatpush1.msra.mxu0 0.0
    %359 = vmatprep.subr.mxu0 0.0
    %360 = vmatpush1.msra.mxu0 0.0
    %361 = vmatprep.subr.mxu0 0.0
    %362 = vmatpush1.msra.mxu0 0.0
    %363 = vmatprep.subr.mxu0 0.0
    %364 = vmatpush1.msra.mxu0 0.0
    %365 = vmatprep.subr.mxu0 0.0
    %366 = vmatpush1.msra.mxu0 0.0
    %367 = vmatprep.subr.mxu0 0.0
    %368 = vmatpush1.msra.mxu0 0.0
    %369 = vmatprep.mubr.f32.mxu0 0.0
    %v370 = vand.u32 %v31, 4294901760
    %371 = vmatmul.mubr.f32.gmra.mrb[0].mxu0 %v370
    %v372 = vpop.f32.mrb[0].mxu0
    %v373 = vadd.f32 %v222, %v372
    %v374 = vpop.f32.mrb[0].mxu0
    %375 = vdwg.mxu0
    %376 = vmatprep.subr.mxu0 0.0
    %v377 = vand.u32 %v118, 4294901760
    %v378 = vsub.f32 %v118, %v377
    %379 = vmatpush1.msra.mxu0 %v378
    %380 = vmatprep.subr.mxu0 0.0
    %v381 = vand.u32 %v119, 4294901760
    %v382 = vsub.f32 %v119, %v381
    %383 = vmatpush1.msra.mxu0 %v382
    %384 = vmatprep.subr.mxu0 0.0
    %v385 = vand.u32 %v120, 4294901760
    %v386 = vsub.f32 %v120, %v385
    %387 = vmatpush1.msra.mxu0 %v386
    %388 = vmatprep.subr.mxu0 0.0
    %v389 = vand.u32 %v121, 4294901760
    %v390 = vsub.f32 %v121, %v389
    %391 = vmatpush1.msra.mxu0 %v390
    %392 = vmatprep.subr.mxu0 0.0
    %v393 = vand.u32 %v122, 4294901760
    %v394 = vsub.f32 %v122, %v393
    %395 = vmatpush1.msra.mxu0 %v394
    %396 = vmatprep.subr.mxu0 0.0
    %v397 = vand.u32 %v123, 4294901760
    %v398 = vsub.f32 %v123, %v397
    %399 = vmatpush1.msra.mxu0 %v398
    %400 = vmatprep.subr.mxu0 0.0
    %v401 = vand.u32 %v124, 4294901760
    %v402 = vsub.f32 %v124, %v401
    %403 = vmatpush1.msra.mxu0 %v402
    %404 = vmatprep.subr.mxu0 0.0
    %v405 = vand.u32 %v125, 4294901760
    %v406 = vsub.f32 %v125, %v405
    %407 = vmatpush1.msra.mxu0 %v406
    %408 = vmatprep.subr.mxu0 0.0
    %v409 = vand.u32 %v126, 4294901760
    %v410 = vsub.f32 %v126, %v409
    %411 = vmatpush1.msra.mxu0 %v410
    %412 = vmatprep.subr.mxu0 0.0
    %v413 = vand.u32 %v127, 4294901760
    %v414 = vsub.f32 %v127, %v413
    %415 = vmatpush1.msra.mxu0 %v414
    %416 = vmatprep.subr.mxu0 0.0
    %v417 = vand.u32 %v128, 4294901760
    %v418 = vsub.f32 %v128, %v417
    %419 = vmatpush1.msra.mxu0 %v418
    %420 = vmatprep.subr.mxu0 0.0
    %v421 = vand.u32 %v129, 4294901760
    %v422 = vsub.f32 %v129, %v421
    %423 = vmatpush1.msra.mxu0 %v422
    %424 = vmatprep.subr.mxu0 0.0
    %v425 = vand.u32 %v130, 4294901760
    %v426 = vsub.f32 %v130, %v425
    %427 = vmatpush1.msra.mxu0 %v426
    %428 = vmatprep.subr.mxu0 0.0
    %v429 = vand.u32 %v131, 4294901760
    %v430 = vsub.f32 %v131, %v429
    %431 = vmatpush1.msra.mxu0 %v430
    %432 = vmatprep.subr.mxu0 0.0
    %v433 = vand.u32 %v132, 4294901760
    %v434 = vsub.f32 %v132, %v433
    %435 = vmatpush1.msra.mxu0 %v434
    %436 = vmatprep.subr.mxu0 0.0
    %v437 = vand.u32 %v133, 4294901760
    %v438 = vsub.f32 %v133, %v437
    %439 = vmatpush1.msra.mxu0 %v438
    %440 = vmatprep.subr.mxu0 0.0
    %441 = vmatpush1.msra.mxu0 0.0
    %442 = vmatprep.subr.mxu0 0.0
    %443 = vmatpush1.msra.mxu0 0.0
    %444 = vmatprep.subr.mxu0 0.0
    %445 = vmatpush1.msra.mxu0 0.0
    %446 = vmatprep.subr.mxu0 0.0
    %447 = vmatpush1.msra.mxu0 0.0
    %448 = vmatprep.subr.mxu0 0.0
    %449 = vmatpush1.msra.mxu0 0.0
    %450 = vmatprep.subr.mxu0 0.0
    %451 = vmatpush1.msra.mxu0 0.0
    %452 = vmatprep.subr.mxu0 0.0
    %453 = vmatpush1.msra.mxu0 0.0
    %454 = vmatprep.subr.mxu0 0.0
    %455 = vmatpush1.msra.mxu0 0.0
    %456 = vmatprep.subr.mxu0 0.0
    %457 = vmatpush1.msra.mxu0 0.0
    %458 = vmatprep.subr.mxu0 0.0
    %459 = vmatpush1.msra.mxu0 0.0
    %460 = vmatprep.subr.mxu0 0.0
    %461 = vmatpush1.msra.mxu0 0.0
    %462 = vmatprep.subr.mxu0 0.0
    %463 = vmatpush1.msra.mxu0 0.0
    %464 = vmatprep.subr.mxu0 0.0
    %465 = vmatpush1.msra.mxu0 0.0
    %466 = vmatprep.subr.mxu0 0.0
    %467 = vmatpush1.msra.mxu0 0.0
    %468 = vmatprep.subr.mxu0 0.0
    %469 = vmatpush1.msra.mxu0 0.0
    %470 = vmatprep.subr.mxu0 0.0
    %471 = vmatpush1.msra.mxu0 0.0
    %472 = vmatprep.mubr.f32.mxu0 0.0
    %v473 = vand.u32 %v31, 4294901760
    %v474 = vsub.f32 %v31, %v473
    %475 = vmatmul.mubr.f32.gmra.mrb[0].mxu0 %v474
    %v476 = vpop.f32.mrb[0].mxu0
    %v477 = vadd.f32 %v373, %v476
    %v478 = vpop.f32.mrb[0].mxu0
    %479 = vdwg.mxu0
    %480 = vmatprep.subr.mxu0 0.0
    %v481 = vand.u32 %v118, 4294901760
    %482 = vmatpush1.msra.mxu0 %v481
    %483 = vmatprep.subr.mxu0 0.0
    %v484 = vand.u32 %v119, 4294901760
    %485 = vmatpush1.msra.mxu0 %v484
    %486 = vmatprep.subr.mxu0 0.0
    %v487 = vand.u32 %v120, 4294901760
    %488 = vmatpush1.msra.mxu0 %v487
    %489 = vmatprep.subr.mxu0 0.0
    %v490 = vand.u32 %v121, 4294901760
    %491 = vmatpush1.msra.mxu0 %v490
    %492 = vmatprep.subr.mxu0 0.0
    %v493 = vand.u32 %v122, 4294901760
    %494 = vmatpush1.msra.mxu0 %v493
    %495 = vmatprep.subr.mxu0 0.0
    %v496 = vand.u32 %v123, 4294901760
    %497 = vmatpush1.msra.mxu0 %v496
    %498 = vmatprep.subr.mxu0 0.0
    %v499 = vand.u32 %v124, 4294901760
    %500 = vmatpush1.msra.mxu0 %v499
    %501 = vmatprep.subr.mxu0 0.0
    %v502 = vand.u32 %v125, 4294901760
    %503 = vmatpush1.msra.mxu0 %v502
    %504 = vmatprep.subr.mxu0 0.0
    %v505 = vand.u32 %v126, 4294901760
    %506 = vmatpush1.msra.mxu0 %v505
    %507 = vmatprep.subr.mxu0 0.0
    %v508 = vand.u32 %v127, 4294901760
    %509 = vmatpush1.msra.mxu0 %v508
    %510 = vmatprep.subr.mxu0 0.0
    %v511 = vand.u32 %v128, 4294901760
    %512 = vmatpush1.msra.mxu0 %v511
    %513 = vmatprep.subr.mxu0 0.0
    %v514 = vand.u32 %v129, 4294901760
    %515 = vmatpush1.msra.mxu0 %v514
    %516 = vmatprep.subr.mxu0 0.0
    %v517 = vand.u32 %v130, 4294901760
    %518 = vmatpush1.msra.mxu0 %v517
    %519 = vmatprep.subr.mxu0 0.0
    %v520 = vand.u32 %v131, 4294901760
    %521 = vmatpush1.msra.mxu0 %v520
    %522 = vmatprep.subr.mxu0 0.0
    %v523 = vand.u32 %v132, 4294901760
    %524 = vmatpush1.msra.mxu0 %v523
    %525 = vmatprep.subr.mxu0 0.0
    %v526 = vand.u32 %v133, 4294901760
    %527 = vmatpush1.msra.mxu0 %v526
    %528 = vmatprep.subr.mxu0 0.0
    %529 = vmatpush1.msra.mxu0 0.0
    %530 = vmatprep.subr.mxu0 0.0
    %531 = vmatpush1.msra.mxu0 0.0
    %532 = vmatprep.subr.mxu0 0.0
    %533 = vmatpush1.msra.mxu0 0.0
    %534 = vmatprep.subr.mxu0 0.0
    %535 = vmatpush1.msra.mxu0 0.0
    %536 = vmatprep.subr.mxu0 0.0
    %537 = vmatpush1.msra.mxu0 0.0
    %538 = vmatprep.subr.mxu0 0.0
    %539 = vmatpush1.msra.mxu0 0.0
    %540 = vmatprep.subr.mxu0 0.0
    %541 = vmatpush1.msra.mxu0 0.0
    %542 = vmatprep.subr.mxu0 0.0
    %543 = vmatpush1.msra.mxu0 0.0
    %544 = vmatprep.subr.mxu0 0.0
    %545 = vmatpush1.msra.mxu0 0.0
    %546 = vmatprep.subr.mxu0 0.0
    %547 = vmatpush1.msra.mxu0 0.0
    %548 = vmatprep.subr.mxu0 0.0
    %549 = vmatpush1.msra.mxu0 0.0
    %550 = vmatprep.subr.mxu0 0.0
    %551 = vmatpush1.msra.mxu0 0.0
    %552 = vmatprep.subr.mxu0 0.0
    %553 = vmatpush1.msra.mxu0 0.0
    %554 = vmatprep.subr.mxu0 0.0
    %555 = vmatpush1.msra.mxu0 0.0
    %556 = vmatprep.subr.mxu0 0.0
    %557 = vmatpush1.msra.mxu0 0.0
    %558 = vmatprep.subr.mxu0 0.0
    %559 = vmatpush1.msra.mxu0 0.0
    %560 = vmatprep.mubr.f32.mxu0 0.0
    %v561 = vand.u32 %v31, 4294901760
    %v562 = vsub.f32 %v31, %v561
    %v563 = vand.u32 %v562, 4294901760
    %564 = vmatmul.mubr.f32.gmra.mrb[0].mxu0 %v563
    %v565 = vpop.f32.mrb[0].mxu0
    %v566 = vadd.f32 %v477, %v565
    %v567 = vpop.f32.mrb[0].mxu0
    %568 = vdwg.mxu0
    %569 = vmatprep.subr.mxu0 0.0
    %v570 = vand.u32 %v118, 4294901760
    %v571 = vsub.f32 %v118, %v570
    %v572 = vand.u32 %v571, 4294901760
    %573 = vmatpush1.msra.mxu0 %v572
    %574 = vmatprep.subr.mxu0 0.0
    %v575 = vand.u32 %v119, 4294901760
    %v576 = vsub.f32 %v119, %v575
    %v577 = vand.u32 %v576, 4294901760
    %578 = vmatpush1.msra.mxu0 %v577
    %579 = vmatprep.subr.mxu0 0.0
    %v580 = vand.u32 %v120, 4294901760
    %v581 = vsub.f32 %v120, %v580
    %v582 = vand.u32 %v581, 4294901760
    %583 = vmatpush1.msra.mxu0 %v582
    %584 = vmatprep.subr.mxu0 0.0
    %v585 = vand.u32 %v121, 4294901760
    %v586 = vsub.f32 %v121, %v585
    %v587 = vand.u32 %v586, 4294901760
    %588 = vmatpush1.msra.mxu0 %v587
    %589 = vmatprep.subr.mxu0 0.0
    %v590 = vand.u32 %v122, 4294901760
    %v591 = vsub.f32 %v122, %v590
    %v592 = vand.u32 %v591, 4294901760
    %593 = vmatpush1.msra.mxu0 %v592
    %594 = vmatprep.subr.mxu0 0.0
    %v595 = vand.u32 %v123, 4294901760
    %v596 = vsub.f32 %v123, %v595
    %v597 = vand.u32 %v596, 4294901760
    %598 = vmatpush1.msra.mxu0 %v597
    %599 = vmatprep.subr.mxu0 0.0
    %v600 = vand.u32 %v124, 4294901760
    %v601 = vsub.f32 %v124, %v600
    %v602 = vand.u32 %v601, 4294901760
    %603 = vmatpush1.msra.mxu0 %v602
    %604 = vmatprep.subr.mxu0 0.0
    %v605 = vand.u32 %v125, 4294901760
    %v606 = vsub.f32 %v125, %v605
    %v607 = vand.u32 %v606, 4294901760
    %608 = vmatpush1.msra.mxu0 %v607
    %609 = vmatprep.subr.mxu0 0.0
    %v610 = vand.u32 %v126, 4294901760
    %v611 = vsub.f32 %v126, %v610
    %v612 = vand.u32 %v611, 4294901760
    %613 = vmatpush1.msra.mxu0 %v612
    %614 = vmatprep.subr.mxu0 0.0
    %v615 = vand.u32 %v127, 4294901760
    %v616 = vsub.f32 %v127, %v615
    %v617 = vand.u32 %v616, 4294901760
    %618 = vmatpush1.msra.mxu0 %v617
    %619 = vmatprep.subr.mxu0 0.0
    %v620 = vand.u32 %v128, 4294901760
    %v621 = vsub.f32 %v128, %v620
    %v622 = vand.u32 %v621, 4294901760
    %623 = vmatpush1.msra.mxu0 %v622
    %624 = vmatprep.subr.mxu0 0.0
    %v625 = vand.u32 %v129, 4294901760
    %v626 = vsub.f32 %v129, %v625
    %v627 = vand.u32 %v626, 4294901760
    %628 = vmatpush1.msra.mxu0 %v627
    %629 = vmatprep.subr.mxu0 0.0
    %v630 = vand.u32 %v130, 4294901760
    %v631 = vsub.f32 %v130, %v630
    %v632 = vand.u32 %v631, 4294901760
    %633 = vmatpush1.msra.mxu0 %v632
    %634 = vmatprep.subr.mxu0 0.0
    %v635 = vand.u32 %v131, 4294901760
    %v636 = vsub.f32 %v131, %v635
    %v637 = vand.u32 %v636, 4294901760
    %638 = vmatpush1.msra.mxu0 %v637
    %639 = vmatprep.subr.mxu0 0.0
    %v640 = vand.u32 %v132, 4294901760
    %v641 = vsub.f32 %v132, %v640
    %v642 = vand.u32 %v641, 4294901760
    %643 = vmatpush1.msra.mxu0 %v642
    %644 = vmatprep.subr.mxu0 0.0
    %v645 = vand.u32 %v133, 4294901760
    %v646 = vsub.f32 %v133, %v645
    %v647 = vand.u32 %v646, 4294901760
    %648 = vmatpush1.msra.mxu0 %v647
    %649 = vmatprep.subr.mxu0 0.0
    %650 = vmatpush1.msra.mxu0 0.0
    %651 = vmatprep.subr.mxu0 0.0
    %652 = vmatpush1.msra.mxu0 0.0
    %653 = vmatprep.subr.mxu0 0.0
    %654 = vmatpush1.msra.mxu0 0.0
    %655 = vmatprep.subr.mxu0 0.0
    %656 = vmatpush1.msra.mxu0 0.0
    %657 = vmatprep.subr.mxu0 0.0
    %658 = vmatpush1.msra.mxu0 0.0
    %659 = vmatprep.subr.mxu0 0.0
    %660 = vmatpush1.msra.mxu0 0.0
    %661 = vmatprep.subr.mxu0 0.0
    %662 = vmatpush1.msra.mxu0 0.0
    %663 = vmatprep.subr.mxu0 0.0
    %664 = vmatpush1.msra.mxu0 0.0
    %665 = vmatprep.subr.mxu0 0.0
    %666 = vmatpush1.msra.mxu0 0.0
    %667 = vmatprep.subr.mxu0 0.0
    %668 = vmatpush1.msra.mxu0 0.0
    %669 = vmatprep.subr.mxu0 0.0
    %670 = vmatpush1.msra.mxu0 0.0
    %671 = vmatprep.subr.mxu0 0.0
    %672 = vmatpush1.msra.mxu0 0.0
    %673 = vmatprep.subr.mxu0 0.0
    %674 = vmatpush1.msra.mxu0 0.0
    %675 = vmatprep.subr.mxu0 0.0
    %676 = vmatpush1.msra.mxu0 0.0
    %677 = vmatprep.subr.mxu0 0.0
    %678 = vmatpush1.msra.mxu0 0.0
    %679 = vmatprep.subr.mxu0 0.0
    %680 = vmatpush1.msra.mxu0 0.0
    %681 = vmatprep.mubr.f32.mxu0 0.0
    %v682 = vand.u32 %v31, 4294901760
    %683 = vmatmul.mubr.f32.gmra.mrb[0].mxu0 %v682
    %v684 = vpop.f32.mrb[0].mxu0
    %v685 = vadd.f32 %v566, %v684
    %v686 = vpop.f32.mrb[0].mxu0
    %687 = vdwg.mxu0
    %688 = vmatprep.subr.mxu0 0.0
    %v689 = vand.u32 %v118, 4294901760
    %690 = vmatpush1.msra.mxu0 %v689
    %691 = vmatprep.subr.mxu0 0.0
    %v692 = vand.u32 %v119, 4294901760
    %693 = vmatpush1.msra.mxu0 %v692
    %694 = vmatprep.subr.mxu0 0.0
    %v695 = vand.u32 %v120, 4294901760
    %696 = vmatpush1.msra.mxu0 %v695
    %697 = vmatprep.subr.mxu0 0.0
    %v698 = vand.u32 %v121, 4294901760
    %699 = vmatpush1.msra.mxu0 %v698
    %700 = vmatprep.subr.mxu0 0.0
    %v701 = vand.u32 %v122, 4294901760
    %702 = vmatpush1.msra.mxu0 %v701
    %703 = vmatprep.subr.mxu0 0.0
    %v704 = vand.u32 %v123, 4294901760
    %705 = vmatpush1.msra.mxu0 %v704
    %706 = vmatprep.subr.mxu0 0.0
    %v707 = vand.u32 %v124, 4294901760
    %708 = vmatpush1.msra.mxu0 %v707
    %709 = vmatprep.subr.mxu0 0.0
    %v710 = vand.u32 %v125, 4294901760
    %711 = vmatpush1.msra.mxu0 %v710
    %712 = vmatprep.subr.mxu0 0.0
    %v713 = vand.u32 %v126, 4294901760
    %714 = vmatpush1.msra.mxu0 %v713
    %715 = vmatprep.subr.mxu0 0.0
    %v716 = vand.u32 %v127, 4294901760
    %717 = vmatpush1.msra.mxu0 %v716
    %718 = vmatprep.subr.mxu0 0.0
    %v719 = vand.u32 %v128, 4294901760
    %720 = vmatpush1.msra.mxu0 %v719
    %721 = vmatprep.subr.mxu0 0.0
    %v722 = vand.u32 %v129, 4294901760
    %723 = vmatpush1.msra.mxu0 %v722
    %724 = vmatprep.subr.mxu0 0.0
    %v725 = vand.u32 %v130, 4294901760
    %726 = vmatpush1.msra.mxu0 %v725
    %727 = vmatprep.subr.mxu0 0.0
    %v728 = vand.u32 %v131, 4294901760
    %729 = vmatpush1.msra.mxu0 %v728
    %730 = vmatprep.subr.mxu0 0.0
    %v731 = vand.u32 %v132, 4294901760
    %732 = vmatpush1.msra.mxu0 %v731
    %733 = vmatprep.subr.mxu0 0.0
    %v734 = vand.u32 %v133, 4294901760
    %735 = vmatpush1.msra.mxu0 %v734
    %736 = vmatprep.subr.mxu0 0.0
    %737 = vmatpush1.msra.mxu0 0.0
    %738 = vmatprep.subr.mxu0 0.0
    %739 = vmatpush1.msra.mxu0 0.0
    %740 = vmatprep.subr.mxu0 0.0
    %741 = vmatpush1.msra.mxu0 0.0
    %742 = vmatprep.subr.mxu0 0.0
    %743 = vmatpush1.msra.mxu0 0.0
    %744 = vmatprep.subr.mxu0 0.0
    %745 = vmatpush1.msra.mxu0 0.0
    %746 = vmatprep.subr.mxu0 0.0
    %747 = vmatpush1.msra.mxu0 0.0
    %748 = vmatprep.subr.mxu0 0.0
    %749 = vmatpush1.msra.mxu0 0.0
    %750 = vmatprep.subr.mxu0 0.0
    %751 = vmatpush1.msra.mxu0 0.0
    %752 = vmatprep.subr.mxu0 0.0
    %753 = vmatpush1.msra.mxu0 0.0
    %754 = vmatprep.subr.mxu0 0.0
    %755 = vmatpush1.msra.mxu0 0.0
    %756 = vmatprep.subr.mxu0 0.0
    %757 = vmatpush1.msra.mxu0 0.0
    %758 = vmatprep.subr.mxu0 0.0
    %759 = vmatpush1.msra.mxu0 0.0
    %760 = vmatprep.subr.mxu0 0.0
    %761 = vmatpush1.msra.mxu0 0.0
    %762 = vmatprep.subr.mxu0 0.0
    %763 = vmatpush1.msra.mxu0 0.0
    %764 = vmatprep.subr.mxu0 0.0
    %765 = vmatpush1.msra.mxu0 0.0
    %766 = vmatprep.subr.mxu0 0.0
    %767 = vmatpush1.msra.mxu0 0.0
    %768 = vmatprep.mubr.f32.mxu0 0.0
    %v769 = vand.u32 %v31, 4294901760
    %770 = vmatmul.mubr.f32.gmra.mrb[0].mxu0 %v769
    %v771 = vpop.f32.mrb[0].mxu0
    %v772 = vadd.f32 %v685, %v771
    %v773 = vpop.f32.mrb[0].mxu0
    %774 = vdwg.mxu0
    %v775 = vrsqrt.pop %v772
    %v776 = vmul.f32 %v772, %v775
    %vm777 = vcmp.eq.f32.partialorder %v772, inf
    %v778 = vsel %vm777, %v772, %v776
    %vm779 = vcmp.eq.f32.partialorder %v772, 0.0
    %v780 = vand.u32 %v772, 2147483648
    %v781 = vsel %vm779, %v780, %v778
    %v782 = vld [vmem:[%s2] sm:$0x3]
    %v783 = vsub.f32 2.0, %v781
    %v784 = vmax.f32 %v783, 0.0
    %v785 = vmul.f32 %v782, %v772
    %v786 = vsub.f32 1.0, %v782
    %v787 = vmul.f32 %v784, %v784
    %v788 = vmul.f32 %v786, %v787
    %v789 = vadd.f32 %v785, %v788
    %s790 = smul.u32 0, 2
    %v791 = vstv %s790
    %v792 = vadd.s32 %v33, %v791
    %vm793 = vcmp.lt.s32.totalorder %v792, 2
    %v794 = vsel %vm793, %v789, 0.0
    %vm795 = vcmask 25600
    %v796 = vsel %vm795, %v794, 0.0
    %797 = vadd.xlane.f32.xlu0 %v796
    %v798 = vpop.xlane.xlu0 %797
    %vm799 = vcmask 1041408
    %v800 = vsel %vm799, %v798, 0.0
    %v801 = vrot.slane %v800, 4
    %v802 = vadd.f32 %v800, %v801
    %v803 = vrot.slane %v802, 2
    %v804 = vadd.f32 %v802, %v803
    %v805 = vrot.slane %v804, 1
    %v806 = vadd.f32 %v804, %v805
    %807 = vst [vmem:[#allocation5] sm:$0xff] %v806
    // Predicated region
    $region18: #{tpu_custom_call.1} parent=1 // pred_check
      _
    $region19: #{tpu_custom_call.1} parent=1 // pred_check_branch
      %809 = sbr.rel (0) target = $region21
    $region20: #{tpu_custom_call.1} parent=1 // pred_region
      %s811 = ssub.s32 128, 128
      %812 = vsyncadd [#allocation4], %s811
      %s814 = sshll.u32 [#allocation5], 4
      %s815 = int_to_ptr.vmem [resolvable:$true] %s814
      %817 = dma.vmem_to_hbm [thread:$0]  %s815, 128, %s3, [#allocation4]
    $region21: #{tpu_custom_call.1} parent=1 // pred_fallthru
      _
    // Predicated region
    $region22: #{tpu_custom_call.1} parent=1 // pred_check
      _
    $region23: #{tpu_custom_call.1} parent=1 // pred_check_branch
      %819 = sbr.rel (0) target = $region25
    $region24: #{tpu_custom_call.1} parent=1 // pred_region
      %820 = dma.done [#allocation4], 128
    $region25: #{tpu_custom_call.1} parent=1 // pred_fallthru
      _
    %821 = vsyncpa [#allocation3], 1
    %822 = vsyncpa [#allocation4], 1

</llo_original>
